<compile_context>
chip_gen: v7x
topology: tpu7x:2x2x1
jax: 0.10.0
libtpu: 0.0.40
codegen_flags: <defaults>
</compile_context>

<pallas_src>
import jax
import jax.numpy as jnp
from jax.experimental import pallas as pl
from jax.experimental.pallas import tpu as pltpu


_NEG_BIG = -1e30  # bias for padded action lanes: exp(pad - max) underflows to 0 in f32


def _round_up(x, m):
    return ((x + m - 1) // m) * m


def _actor_kernel(x_ref, w1_ref, b1_ref, w2_ref, b2_ref, out_ref):
    # x:  [TM, S] f32    w1: [S, H] bf16   b1: [1, H]  f32
    # w2: [H, Ap] bf16   b2: [1, Ap] f32   out: [TM, Ap] bf16
    # In-kernel bf16 cast of the streamed activation: cheap VPU op hidden under
    # the MXU / DMA; keeps the wrapper from re-writing the state in HBM.
    x = x_ref[...].astype(jnp.bfloat16)

    # fc1 + ReLU  (MXU bf16 matmul, f32 accumulate; elementwise path stays f32)
    h = jnp.dot(x, w1_ref[...], preferred_element_type=jnp.float32) + b1_ref[...]
    h = jnp.maximum(h, 0.0)

    # fc2  (padded action lanes get a -1e30 bias -> contribute 0 to the softmax)
    logits = (
        jnp.dot(h.astype(jnp.bfloat16), w2_ref[...], preferred_element_type=jnp.float32)
        + b2_ref[...]
    )

    # numerically stable softmax over the last (lane) axis.
    # Exact reciprocal (not approx): keeps every row summing to 1 to f32
    # precision; the divide is over a (TM, 1) column so its cost is negligible.
    m = jnp.max(logits, axis=-1, keepdims=True)
    e = jnp.exp(logits - m)
    denom = jnp.sum(e, axis=-1, keepdims=True)
    inv = 1.0 / denom
    out_ref[...] = (e * inv).astype(out_ref.dtype)


def prepare_actor_params(w1, b1, w2, b2):
    """One-time weight preprocessing, hoisted out of the per-step forward path.

    w1: [S, H], b1: [H], w2: [H, A], b2: [A]  (already [in, out] layout).
    Returns (w1_bf16, b1_f32[1,H], w2_bf16[H,A_pad], b2_f32[1,A_pad]).
    """
    S, H = w1.shape
    A = w2.shape[1]
    A_pad = _round_up(A, 128)                       # lane-dense output slab
    w1_b = w1.astype(jnp.bfloat16)
    b1_2d = b1.reshape(1, H).astype(jnp.float32)
    w2_b = jnp.pad(w2, ((0, 0), (0, A_pad - A))).astype(jnp.bfloat16)
    b2_2d = jnp.pad(
        b2.reshape(1, A), ((0, 0), (0, A_pad - A)), constant_values=_NEG_BIG
    ).astype(jnp.float32)
    return (w1_b, b1_2d, w2_b, b2_2d)


def actor_forward(state, prepped_params, action_dim, *, tm=1024):
    """state: [B, state_dim] f32. Returns softmax action probs [B, action_dim] f32.

    tm is the max batch-tile size (rows per grid step). Default 1024 amortizes
    the ~0.35us per-grid-step overhead; all buffers stay well under the scoped
    VMEM limit (see vmem_limit_bytes below). For B > tm the grid has >=2
    "parallel" steps, so v7x's two TensorCores both get work.
    """
    w1_b, b1_2d, w2_b, b2_2d = prepped_params
    B, S = state.shape
    H = w1_b.shape[1]
    A_pad = w2_b.shape[1]

    # Balanced batch tiling: pick the number of tiles needed at max size tm,
    # then shrink the tile so the last tile has minimal dead padded rows
    # (e.g. B=300 -> one 304-row tile; B=1500, tm=1024 -> two 752-row tiles).
    tm_c = max(8, _round_up(tm, 8))
    B8 = _round_up(max(B, 1), 8)
    n_tiles = pl.cdiv(B8, tm_c)
    tm_eff = _round_up(pl.cdiv(B8, n_tiles), 8)
    B_pad = n_tiles * tm_eff

    x = state
    if B_pad != B:  # only pad when actually needed (padded rows are sliced off)
        x = jnp.pad(x, ((0, B_pad - B), (0, 0)))

    out = pl.pallas_call(
        _actor_kernel,
        out_shape=jax.ShapeDtypeStruct((B_pad, A_pad), jnp.bfloat16),
        grid=(n_tiles,),
        in_specs=[
            pl.BlockSpec((tm_eff, S), lambda i: (i, 0)),   # streamed state tile (f32)
            pl.BlockSpec((S, H), lambda i: (0, 0)),        # w1 resident
            pl.BlockSpec((1, H), lambda i: (0, 0)),        # b1 resident
            pl.BlockSpec((H, A_pad), lambda i: (0, 0)),    # w2 resident
            pl.BlockSpec((1, A_pad), lambda i: (0, 0)),    # b2 resident
        ],
        out_specs=pl.BlockSpec((tm_eff, A_pad), lambda i: (i, 0)),
        compiler_params=pltpu.CompilerParams(
            # batch tiles are independent -> shards across TCs on v7x
            dimension_semantics=("parallel",),
            # guard for v5e's 16 MiB default scoped-VMEM limit when tm is large
            # (at tm=1024 total VMEM use is only a few MiB; 32 MiB is safe on
            # v5e/v6e/v7x physical VMEM).
            vmem_limit_bytes=32 * 1024 * 1024,
        ),
    )(x, w1_b, b1_2d, w2_b, b2_2d)
    # slice off padded batch rows / action lanes, return f32 like the torch module
    return out[:B, :action_dim].astype(jnp.float32)


def init_actor_params(key, state_dim, action_dim, hidden=256):
    """Deterministic synthetic params (PyTorch-style uniform fan-in init)."""
    k1, k2, k3, k4 = jax.random.split(key, 4)
    bound1 = 1.0 / jnp.sqrt(state_dim)
    bound2 = 1.0 / jnp.sqrt(hidden)
    # stored as [in, out] (transpose of torch's [out, in]) for direct x @ W
    w1 = jax.random.uniform(k1, (state_dim, hidden), jnp.float32, -bound1, bound1)
    b1 = jax.random.uniform(k2, (hidden,), jnp.float32, -bound1, bound1)
    w2 = jax.random.uniform(k3, (hidden, action_dim), jnp.float32, -bound2, bound2)
    b2 = jax.random.uniform(k4, (action_dim,), jnp.float32, -bound2, bound2)
    return w1, b1, w2, b2


def _reference(state, w1, b1, w2, b2):
    # matches the kernel's bf16-MXU / f32-accumulate numerics
    h = jnp.maximum(
        jnp.dot(state.astype(jnp.bfloat16), w1.astype(jnp.bfloat16),
                preferred_element_type=jnp.float32) + b1, 0.0)
    logits = jnp.dot(h.astype(jnp.bfloat16), w2.astype(jnp.bfloat16),
                     preferred_element_type=jnp.float32) + b2
    return jax.nn.softmax(logits, axis=1)


if __name__ == "__main__":
    key = jax.random.PRNGKey(0)
    batch, state_dim, action_dim = 8, 32, 8

    k_state, k_params = jax.random.split(key)
    state = jax.random.normal(k_state, (batch, state_dim), jnp.float32)
    w1, b1, w2, b2 = init_actor_params(k_params, state_dim, action_dim)
    prepped = prepare_actor_params(w1, b1, w2, b2)

    probs = jax.block_until_ready(actor_forward(state, prepped, action_dim))
    ref = _reference(state, w1, b1, w2, b2)
    assert probs.shape == (batch, action_dim)
    # exact divide in-kernel; only bf16 output rounding (<=2^-9) perturbs the sum
    assert jnp.allclose(jnp.sum(probs, axis=1), 1.0, atol=5e-3)
    assert jnp.allclose(probs, ref, atol=1e-2)

    # also exercise the multi-tile / padded-batch path (small tm forces a 3-step grid)
    big_state = jax.random.normal(jax.random.PRNGKey(7), (300, state_dim), jnp.float32)
    big_probs = jax.block_until_ready(
        actor_forward(big_state, prepped, action_dim, tm=128))
    big_ref = _reference(big_state, w1, b1, w2, b2)
    assert big_probs.shape == (300, action_dim)
    assert jnp.allclose(jnp.sum(big_probs, axis=1), 1.0, atol=5e-3)
    assert jnp.allclose(big_probs, big_ref, atol=1e-2)

    print("KERNEL_OK")
</pallas_src>

<mosaic_0001>
module attributes {stable_mosaic.version = 11 : i64} {
  func.func @_actor_kernel(%arg0: i32, %arg1: memref<8x32xf32, #tpu.memory_space<vmem>>, %arg2: memref<32x256xbf16, #tpu.memory_space<vmem>>, %arg3: memref<1x256xf32, #tpu.memory_space<vmem>>, %arg4: memref<256x128xbf16, #tpu.memory_space<vmem>>, %arg5: memref<1x128xf32, #tpu.memory_space<vmem>>, %arg6: memref<8x128xbf16, #tpu.memory_space<vmem>>) attributes {dimension_semantics = [#tpu.dimension_semantics<parallel>], iteration_bounds = array<i64: 1>, scalar_prefetch = 0 : i64, scratch_operands = 0 : i64, tpu.core_type = #tpu.core_type<tc>, window_params = [{transform_indices = @transform_0, window_bounds = array<i64: 8, 32>}, {pipeline_mode = #tpu.pipeline_mode<synchronous>, transform_indices = @transform_1, window_bounds = array<i64: 32, 256>}, {pipeline_mode = #tpu.pipeline_mode<synchronous>, transform_indices = @transform_2, window_bounds = array<i64: 1, 256>}, {pipeline_mode = #tpu.pipeline_mode<synchronous>, transform_indices = @transform_3, window_bounds = array<i64: 256, 128>}, {pipeline_mode = #tpu.pipeline_mode<synchronous>, transform_indices = @transform_4, window_bounds = array<i64: 1, 128>}, {transform_indices = @transform_5, window_bounds = array<i64: 8, 128>}]} {
    %c0 = arith.constant 0 : index
    %c0_0 = arith.constant 0 : index
    %0 = vector.load %arg1[%c0, %c0_0] : memref<8x32xf32, #tpu.memory_space<vmem>>, vector<8x32xf32>
    %1 = arith.truncf %0 : vector<8x32xf32> to vector<8x32xbf16>
    %c0_1 = arith.constant 0 : index
    %c0_2 = arith.constant 0 : index
    %2 = vector.load %arg2[%c0_1, %c0_2] : memref<32x256xbf16, #tpu.memory_space<vmem>>, vector<32x256xbf16>
    %cst = arith.constant dense<0.000000e+00> : vector<8x256xf32>
    %3 = tpu.matmul %1, %2, %cst {dimension_numbers = #tpu.dot_dimension_numbers<[1], [0], [0], [1], [0, 0, 1, 1], [], []>} : vector<8x32xbf16>, vector<32x256xbf16>, vector<8x256xf32> -> vector<8x256xf32>
    %c0_3 = arith.constant 0 : index
    %c0_4 = arith.constant 0 : index
    %4 = vector.load %arg3[%c0_3, %c0_4] : memref<1x256xf32, #tpu.memory_space<vmem>>, vector<1x256xf32>
    %5 = vector.broadcast %4 : vector<1x256xf32> to vector<8x256xf32>
    %6 = arith.addf %3, %5 : vector<8x256xf32>
    %cst_5 = arith.constant 0.000000e+00 : f32
    %7 = vector.broadcast %cst_5 : f32 to vector<8x256xf32>
    %8 = arith.maximumf %6, %7 : vector<8x256xf32>
    %9 = arith.truncf %8 : vector<8x256xf32> to vector<8x256xbf16>
    %c0_6 = arith.constant 0 : index
    %c0_7 = arith.constant 0 : index
    %10 = vector.load %arg4[%c0_6, %c0_7] : memref<256x128xbf16, #tpu.memory_space<vmem>>, vector<256x128xbf16>
    %cst_8 = arith.constant dense<0.000000e+00> : vector<8x128xf32>
    %11 = tpu.matmul %9, %10, %cst_8 {dimension_numbers = #tpu.dot_dimension_numbers<[1], [0], [0], [1], [0, 0, 1, 1], [], []>} : vector<8x256xbf16>, vector<256x128xbf16>, vector<8x128xf32> -> vector<8x128xf32>
    %c0_9 = arith.constant 0 : index
    %c0_10 = arith.constant 0 : index
    %12 = vector.load %arg5[%c0_9, %c0_10] : memref<1x128xf32, #tpu.memory_space<vmem>>, vector<1x128xf32>
    %13 = vector.broadcast %12 : vector<1x128xf32> to vector<8x128xf32>
    %14 = arith.addf %11, %13 : vector<8x128xf32>
    %cst_11 = arith.constant dense<0xFF800000> : vector<8xf32>
    %15 = vector.multi_reduction <maximumf>, %14, %cst_11 [1] : vector<8x128xf32> to vector<8xf32>
    %16 = vector.shape_cast %15 : vector<8xf32> to vector<8x1xf32>
    %17 = vector.broadcast %16 : vector<8x1xf32> to vector<8x128xf32>
    %18 = arith.subf %14, %17 : vector<8x128xf32>
    %19 = math.exp %18 : vector<8x128xf32>
    %cst_12 = arith.constant dense<0.000000e+00> : vector<8xf32>
    %20 = vector.multi_reduction <add>, %19, %cst_12 [1] : vector<8x128xf32> to vector<8xf32>
    %21 = vector.shape_cast %20 : vector<8xf32> to vector<8x1xf32>
    %cst_13 = arith.constant 1.000000e+00 : f32
    %22 = vector.broadcast %cst_13 : f32 to vector<8x1xf32>
    %23 = arith.divf %22, %21 : vector<8x1xf32>
    %24 = vector.broadcast %23 : vector<8x1xf32> to vector<8x128xf32>
    %25 = arith.mulf %19, %24 : vector<8x128xf32>
    %26 = arith.truncf %25 : vector<8x128xf32> to vector<8x128xbf16>
    %c0_14 = arith.constant 0 : index
    %c0_15 = arith.constant 0 : index
    %27 = vector.load %arg6[%c0_14, %c0_15] : memref<8x128xbf16, #tpu.memory_space<vmem>>, vector<8x128xbf16>
    tpu.vector_store %arg6[%c0_14, %c0_15], %26 {strides = array<i32>} : memref<8x128xbf16, #tpu.memory_space<vmem>>, vector<8x128xbf16>,
    return
  }
  func.func @transform_0(%arg0: i32) -> (i32, i32) {
    %c0_i32 = arith.constant 0 : i32
    %c0_i32_0 = arith.constant 0 : i32
    return %arg0, %c0_i32 : i32, i32
  }
  func.func @transform_1(%arg0: i32) -> (i32, i32) {
    %c0_i32 = arith.constant 0 : i32
    %c0_i32_0 = arith.constant 0 : i32
    %c0_i32_1 = arith.constant 0 : i32
    return %c0_i32, %c0_i32_0 : i32, i32
  }
  func.func @transform_2(%arg0: i32) -> (i32, i32) {
    %c0_i32 = arith.constant 0 : i32
    %c0_i32_0 = arith.constant 0 : i32
    %c0_i32_1 = arith.constant 0 : i32
    return %c0_i32, %c0_i32_0 : i32, i32
  }
  func.func @transform_3(%arg0: i32) -> (i32, i32) {
    %c0_i32 = arith.constant 0 : i32
    %c0_i32_0 = arith.constant 0 : i32
    %c0_i32_1 = arith.constant 0 : i32
    return %c0_i32, %c0_i32_0 : i32, i32
  }
  func.func @transform_4(%arg0: i32) -> (i32, i32) {
    %c0_i32 = arith.constant 0 : i32
    %c0_i32_0 = arith.constant 0 : i32
    %c0_i32_1 = arith.constant 0 : i32
    return %c0_i32, %c0_i32_0 : i32, i32
  }
  func.func @transform_5(%arg0: i32) -> (i32, i32) {
    %c0_i32 = arith.constant 0 : i32
    %c0_i32_0 = arith.constant 0 : i32
    return %arg0, %c0_i32 : i32, i32
  }
}

</mosaic_0001>

<llo_original>
// kernel: tpu_custom_call.1
$region0: #{tpu_custom_call.1}
  #allocation0 [shape = 'u32[]', space=smem, size = 0x4, offset = 0x4, fixed_abs, tag = 'smem constant byte address 0x4 - core index']
  #allocation1 [shape = 'u32[144,128]{1,0:T(1,128)}', space=vmem, size = 0x12000, scoped, tag = 'internal scratch']
  %s0 = inlined_call_operand.hbm [shape: f32[8,32], index: 0, kind: input, shape index: {}]
  %s1 = inlined_call_operand.hbm [shape: bf16[32,256], index: 1, kind: input, shape index: {}]
  %s2 = inlined_call_operand.vmem [shape: f32[1,256], index: 2, kind: input, shape index: {}]
  %s3 = inlined_call_operand.hbm [shape: bf16[256,128], index: 3, kind: input, shape index: {}]
  %s4 = inlined_call_operand.vmem [shape: f32[1,128], index: 4, kind: input, shape index: {}]
  %s5 = inlined_call_operand.hbm [shape: bf16[8,128], index: 5, kind: output, shape index: {}]
  %s6 = sld [smem:[#allocation0]]
  $region42: #{tpu_custom_call.1} parent=0
    _
  %s8 = ssub.s32 1, %s6
  %s9 = scalar_select 0, %s8, %s6
  $region1: #{tpu_custom_call.1} parent=0
    #allocation2 [shape = 'u8[4096]{0}', space=vmem, size = 0x1000, scoped, tag = 'input window, operand 0, single buffered']
    #allocation3 [shape = 's32[1]{0}', space=sflag, size = 0x4, scoped, tag = 'scoped memory for tpu_custom_call.1']
    #allocation4 [shape = 's32[1]{0}', space=sflag, size = 0x4, scoped, tag = 'scoped memory for tpu_custom_call.1']
    #allocation5 [shape = 'u8[16384]{0}', space=vmem, size = 0x4000, scoped, tag = 'input window, operand 1, single buffered']
    #allocation6 [shape = 's32[1]{0}', space=sflag, size = 0x4, scoped, tag = 'scoped memory for tpu_custom_call.1']
    #allocation7 [shape = 'u8[65536]{0}', space=vmem, size = 0x10000, scoped, tag = 'input window, operand 3, single buffered']
    #allocation8 [shape = 'u8[2048]{0}', space=vmem, size = 0x800, scoped, tag = 'output window, operand 0, single buffered']
    %10 = vsyncpa [#allocation3], 0
    %11 = vsyncpa [#allocation6], 0
    %12 = vsyncpa [#allocation4], 0
    // Predicated region
    $region2: #{tpu_custom_call.1} parent=1 // pred_check
      _
    $region3: #{tpu_custom_call.1} parent=1 // pred_check_branch
      %14 = sbr.rel (0) target = $region5
    $region4: #{tpu_custom_call.1} parent=1 // pred_region
      %s16 = ssub.s32 128, 128
      %17 = vsyncadd [#allocation3], %s16
      %s19 = sshll.u32 [#allocation2], 4
      %s20 = int_to_ptr.vmem [resolvable:$true] %s19
      %22 = dma.hbm_to_vmem [thread:$0]  %s0, 128, %s20, [#allocation3]
    $region5: #{tpu_custom_call.1} parent=1 // pred_fallthru
      _
    // Predicated region
    $region6: #{tpu_custom_call.1} parent=1 // pred_check
      _
    $region7: #{tpu_custom_call.1} parent=1 // pred_check_branch
      %24 = sbr.rel (0) target = $region9
    $region8: #{tpu_custom_call.1} parent=1 // pred_region
      %s26 = ssub.s32 512, 512
      %27 = vsyncadd [#allocation6], %s26
      %s28 = sshll.u32 [#allocation5], 4
      %s29 = int_to_ptr.vmem [resolvable:$true] %s28
      %34 = dma.hbm_to_vmem [thread:$0]  %s1, 512, %s29, [#allocation6], 128, 128, 8
    $region9: #{tpu_custom_call.1} parent=1 // pred_fallthru
      _
    // Predicated region
    $region10: #{tpu_custom_call.1} parent=1 // pred_check
      _
    $region11: #{tpu_custom_call.1} parent=1 // pred_check_branch
      %36 = sbr.rel (0) target = $region13
    $region12: #{tpu_custom_call.1} parent=1 // pred_region
      _
    $region13: #{tpu_custom_call.1} parent=1 // pred_fallthru
      _
    // Predicated region
    $region14: #{tpu_custom_call.1} parent=1 // pred_check
      _
    $region15: #{tpu_custom_call.1} parent=1 // pred_check_branch
      %38 = sbr.rel (0) target = $region17
    $region16: #{tpu_custom_call.1} parent=1 // pred_region
      %s40 = ssub.s32 2048, 2048
      %41 = vsyncadd [#allocation6], %s40
      %s42 = sshll.u32 [#allocation7], 4
      %s43 = int_to_ptr.vmem [resolvable:$true] %s42
      %48 = dma.hbm_to_vmem [thread:$0]  %s3, 2048, %s43, [#allocation6], 64, 64, 4
    $region17: #{tpu_custom_call.1} parent=1 // pred_fallthru
      _
    // Predicated region
    $region18: #{tpu_custom_call.1} parent=1 // pred_check
      _
    $region19: #{tpu_custom_call.1} parent=1 // pred_check_branch
      %50 = sbr.rel (0) target = $region21
    $region20: #{tpu_custom_call.1} parent=1 // pred_region
      _
    $region21: #{tpu_custom_call.1} parent=1 // pred_fallthru
      _
    // Predicated region
    $region22: #{tpu_custom_call.1} parent=1 // pred_check
      _
    $region23: #{tpu_custom_call.1} parent=1 // pred_check_branch
      %52 = sbr.rel (0) target = $region25
    $region24: #{tpu_custom_call.1} parent=1 // pred_region
      %53 = dma.done [#allocation3], 128
    $region25: #{tpu_custom_call.1} parent=1 // pred_fallthru
      _
    // Predicated region
    $region26: #{tpu_custom_call.1} parent=1 // pred_check
      _
    $region27: #{tpu_custom_call.1} parent=1 // pred_check_branch
      %55 = sbr.rel (0) target = $region29
    $region28: #{tpu_custom_call.1} parent=1 // pred_region
      %56 = dma.done [#allocation6], 512
    $region29: #{tpu_custom_call.1} parent=1 // pred_fallthru
      _
    // Predicated region
    $region30: #{tpu_custom_call.1} parent=1 // pred_check
      _
    $region31: #{tpu_custom_call.1} parent=1 // pred_check_branch
      %58 = sbr.rel (0) target = $region33
    $region32: #{tpu_custom_call.1} parent=1 // pred_region
      %59 = dma.done [#allocation6], 2048
    $region33: #{tpu_custom_call.1} parent=1 // pred_fallthru
      _
    %v61 = vld [vmem:[#allocation2] sm:$0xff]
    %v62 = vpack.c.bf16 %v61, %v61
    %v63 = vld [vmem:[#allocation5] sm:$0xff]
    %v64 = vld [vmem:[#allocation5 + $0x8] sm:$0xff]
    %v65 = vld [vmem:[#allocation5 + $0x10] sm:$0xff]
    %v66 = vld [vmem:[#allocation5 + $0x18] sm:$0xff]
    %v67 = vld [vmem:[%s2] sm:$0x3]
    %v69 = vlaneseq
    %v70 = vshrl.u32 %v69, 7
    %v71 = vsub.s32 0, %v70
    %v72 = vrot.slane %v67, %v71
    %v73 = vlaneseq
    %v74 = vshrl.u32 %v73, 7
    %v75 = vsub.s32 1, %v74
    %v76 = vrot.slane %v67, %v75
    %v83 = vunpack.c.l.b16 %v63
    %v84 = vunpack.c.h.b16 %v63
    %v85 = vunpack.c.l.b16 %v64
    %v86 = vunpack.c.h.b16 %v64
    %v87 = vunpack.c.l.b16 %v65
    %v88 = vunpack.c.h.b16 %v65
    %v89 = vunpack.c.l.b16 %v66
    %v90 = vunpack.c.h.b16 %v66
    %v91 = vpack.c.b16 %v85, %v83
    %v92 = vpack.c.b16 %v86, %v84
    %v93 = vpack.c.b16 %v89, %v87
    %v94 = vpack.c.b16 %v90, %v88
    %vm99 = vcmask 261120
    %v101 = vsel %vm99, %v62, 0
    %103 = vmatprep.subr.bf16.mxu0 %v92
    %104 = vmatpush1.bf16.msra.mxu0 %v91
    %105 = vmatprep.subr.bf16.mxu0 %v94
    %106 = vmatpush1.bf16.msra.mxu0 %v93
    %107 = vmatprep.subr.bf16.mxu0 0
    %108 = vmatpush1.bf16.msra.mxu0 0
    %109 = vmatprep.subr.bf16.mxu0 0
    %110 = vmatpush1.bf16.msra.mxu0 0
    %111 = vmatprep.subr.bf16.mxu0 0
    %112 = vmatpush1.bf16.msra.mxu0 0
    %113 = vmatprep.subr.bf16.mxu0 0
    %114 = vmatpush1.bf16.msra.mxu0 0
    %115 = vmatprep.subr.bf16.mxu0 0
    %116 = vmatpush1.bf16.msra.mxu0 0
    %117 = vmatprep.subr.bf16.mxu0 0
    %118 = vmatpush1.bf16.msra.mxu0 0
    %119 = vmatprep.subr.bf16.mxu0 0
    %120 = vmatpush1.bf16.msra.mxu0 0
    %121 = vmatprep.subr.bf16.mxu0 0
    %122 = vmatpush1.bf16.msra.mxu0 0
    %123 = vmatprep.subr.bf16.mxu0 0
    %124 = vmatpush1.bf16.msra.mxu0 0
    %125 = vmatprep.subr.bf16.mxu0 0
    %126 = vmatpush1.bf16.msra.mxu0 0
    %127 = vmatprep.subr.bf16.mxu0 0
    %128 = vmatpush1.bf16.msra.mxu0 0
    %129 = vmatprep.subr.bf16.mxu0 0
    %130 = vmatpush1.bf16.msra.mxu0 0
    %131 = vmatprep.subr.bf16.mxu0 0
    %132 = vmatpush1.bf16.msra.mxu0 0
    %133 = vmatprep.subr.bf16.mxu0 0
    %134 = vmatpush1.bf16.msra.mxu0 0
    %135 = vmatprep.mubr.bf16.mxu0 0
    %136 = vmatmul.mubr.bf16.gmra.mrb[0].mxu0 %v101
    %v137 = vpop.f32.mrb[0].mxu0
    %v138 = vadd.f32 %v72, %v137
    %v139 = vpop.f32.mrb[0].mxu0
    %v140 = vadd.f32 %v76, %v139
    %v141 = vpop.f32.mrb[0].mxu0
    %v142 = vpop.f32.mrb[0].mxu0
    %143 = vdwg.mxu0
    %v144 = vmax.f32 %v138, 0.0
    %v145 = vmax.f32 %v140, 0.0
    %v146 = vpack.c.bf16 %v144, %v144
    %v147 = vpack.c.bf16 %v145, %v145
    %v148 = vld [vmem:[#allocation7] sm:$0xf]
    %v149 = vld [vmem:[#allocation7 + $0x4] sm:$0xf]
    %v150 = vld [vmem:[#allocation7 + $0x8] sm:$0xf]
    %v151 = vld [vmem:[#allocation7 + $0xc] sm:$0xf]
    %v152 = vld [vmem:[#allocation7 + $0x10] sm:$0xf]
    %v153 = vld [vmem:[#allocation7 + $0x14] sm:$0xf]
    %v154 = vld [vmem:[#allocation7 + $0x18] sm:$0xf]
    %v155 = vld [vmem:[#allocation7 + $0x1c] sm:$0xf]
    %v156 = vld [vmem:[#allocation7 + $0x20] sm:$0xf]
    %v157 = vld [vmem:[#allocation7 + $0x24] sm:$0xf]
    %v158 = vld [vmem:[#allocation7 + $0x28] sm:$0xf]
    %v159 = vld [vmem:[#allocation7 + $0x2c] sm:$0xf]
    %v160 = vld [vmem:[#allocation7 + $0x30] sm:$0xf]
    %v161 = vld [vmem:[#allocation7 + $0x34] sm:$0xf]
    %v162 = vld [vmem:[#allocation7 + $0x38] sm:$0xf]
    %v163 = vld [vmem:[#allocation7 + $0x3c] sm:$0xf]
    %v164 = vld [vmem:[#allocation7 + $0x40] sm:$0xf]
    %v165 = vld [vmem:[#allocation7 + $0x44] sm:$0xf]
    %v166 = vld [vmem:[#allocation7 + $0x48] sm:$0xf]
    %v167 = vld [vmem:[#allocation7 + $0x4c] sm:$0xf]
    %v168 = vld [vmem:[#allocation7 + $0x50] sm:$0xf]
    %v169 = vld [vmem:[#allocation7 + $0x54] sm:$0xf]
    %v170 = vld [vmem:[#allocation7 + $0x58] sm:$0xf]
    %v171 = vld [vmem:[#allocation7 + $0x5c] sm:$0xf]
    %v172 = vld [vmem:[#allocation7 + $0x60] sm:$0xf]
    %v173 = vld [vmem:[#allocation7 + $0x64] sm:$0xf]
    %v174 = vld [vmem:[#allocation7 + $0x68] sm:$0xf]
    %v175 = vld [vmem:[#allocation7 + $0x6c] sm:$0xf]
    %v176 = vld [vmem:[#allocation7 + $0x70] sm:$0xf]
    %v177 = vld [vmem:[#allocation7 + $0x74] sm:$0xf]
    %v178 = vld [vmem:[#allocation7 + $0x78] sm:$0xf]
    %v179 = vld [vmem:[#allocation7 + $0x7c] sm:$0xf]
    %v180 = vld [vmem:[%s4] sm:$0x1]
    %v182 = vlaneseq
    %v183 = vshrl.u32 %v182, 7
    %v184 = vsub.s32 0, %v183
    %v185 = vrot.slane %v180, %v184
    %v219 = vunpack.c.l.b16 %v148
    %v220 = vunpack.c.l.b16 %v149
    %v221 = vunpack.c.l.b16 %v150
    %v222 = vunpack.c.l.b16 %v151
    %v223 = vunpack.c.l.b16 %v152
    %v224 = vunpack.c.l.b16 %v153
    %v225 = vunpack.c.l.b16 %v154
    %v226 = vunpack.c.l.b16 %v155
    %v227 = vunpack.c.l.b16 %v156
    %v228 = vunpack.c.l.b16 %v157
    %v229 = vunpack.c.l.b16 %v158
    %v230 = vunpack.c.l.b16 %v159
    %v231 = vunpack.c.l.b16 %v160
    %v232 = vunpack.c.l.b16 %v161
    %v233 = vunpack.c.l.b16 %v162
    %v234 = vunpack.c.l.b16 %v163
    %v235 = vunpack.c.l.b16 %v164
    %v236 = vunpack.c.l.b16 %v165
    %v237 = vunpack.c.l.b16 %v166
    %v238 = vunpack.c.l.b16 %v167
    %v239 = vunpack.c.l.b16 %v168
    %v240 = vunpack.c.l.b16 %v169
    %v241 = vunpack.c.l.b16 %v170
    %v242 = vunpack.c.l.b16 %v171
    %v243 = vunpack.c.l.b16 %v172
    %v244 = vunpack.c.l.b16 %v173
    %v245 = vunpack.c.l.b16 %v174
    %v246 = vunpack.c.l.b16 %v175
    %v247 = vunpack.c.l.b16 %v176
    %v248 = vunpack.c.l.b16 %v177
    %v249 = vunpack.c.l.b16 %v178
    %v250 = vunpack.c.l.b16 %v179
    %v251 = vpack.c.b16 %v220, %v219
    %v252 = vpack.c.b16 %v222, %v221
    %v253 = vpack.c.b16 %v224, %v223
    %v254 = vpack.c.b16 %v226, %v225
    %v255 = vpack.c.b16 %v228, %v227
    %v256 = vpack.c.b16 %v230, %v229
    %v257 = vpack.c.b16 %v232, %v231
    %v258 = vpack.c.b16 %v234, %v233
    %v259 = vpack.c.b16 %v236, %v235
    %v260 = vpack.c.b16 %v238, %v237
    %v261 = vpack.c.b16 %v240, %v239
    %v262 = vpack.c.b16 %v242, %v241
    %v263 = vpack.c.b16 %v244, %v243
    %v264 = vpack.c.b16 %v246, %v245
    %v265 = vpack.c.b16 %v248, %v247
    %v266 = vpack.c.b16 %v250, %v249
    %283 = vmatprep.subr.bf16.mxu0 0
    %284 = vmatpush1.bf16.msra.mxu0 %v251
    %285 = vmatprep.subr.bf16.mxu0 0
    %286 = vmatpush1.bf16.msra.mxu0 %v252
    %287 = vmatprep.subr.bf16.mxu0 0
    %288 = vmatpush1.bf16.msra.mxu0 %v253
    %289 = vmatprep.subr.bf16.mxu0 0
    %290 = vmatpush1.bf16.msra.mxu0 %v254
    %291 = vmatprep.subr.bf16.mxu0 0
    %292 = vmatpush1.bf16.msra.mxu0 %v255
    %293 = vmatprep.subr.bf16.mxu0 0
    %294 = vmatpush1.bf16.msra.mxu0 %v256
    %295 = vmatprep.subr.bf16.mxu0 0
    %296 = vmatpush1.bf16.msra.mxu0 %v257
    %297 = vmatprep.subr.bf16.mxu0 0
    %298 = vmatpush1.bf16.msra.mxu0 %v258
    %299 = vmatprep.subr.bf16.mxu0 0
    %300 = vmatpush1.bf16.msra.mxu0 %v259
    %301 = vmatprep.subr.bf16.mxu0 0
    %302 = vmatpush1.bf16.msra.mxu0 %v260
    %303 = vmatprep.subr.bf16.mxu0 0
    %304 = vmatpush1.bf16.msra.mxu0 %v261
    %305 = vmatprep.subr.bf16.mxu0 0
    %306 = vmatpush1.bf16.msra.mxu0 %v262
    %307 = vmatprep.subr.bf16.mxu0 0
    %308 = vmatpush1.bf16.msra.mxu0 %v263
    %309 = vmatprep.subr.bf16.mxu0 0
    %310 = vmatpush1.bf16.msra.mxu0 %v264
    %311 = vmatprep.subr.bf16.mxu0 0
    %312 = vmatpush1.bf16.msra.mxu0 %v265
    %313 = vmatprep.subr.bf16.mxu0 0
    %314 = vmatpush1.bf16.msra.mxu0 %v266
    %315 = vmatprep.mubr.bf16.mxu0 %v147
    %316 = vmatmul.mubr.bf16.gmra.mrb[0].mxu0 %v146
    %v317 = vpop.f32.mrb[0].mxu0
    %v318 = vadd.f32 %v185, %v317
    %v319 = vpop.f32.mrb[0].mxu0
    %v320 = vpop.f32.mrb[0].mxu0
    %v321 = vpop.f32.mrb[0].mxu0
    %322 = vdwg.mxu0
    %323 = vmax.xlane.f32.xlu0 %v318
    %v324 = vpop.xlane.xlu0 %323
    %v325 = vsub.f32 %v318, %v324
    %v326 = vmul.f32 %v325, 1.442695
    %v327 = vpow.pop %v326
    %328 = vadd.xlane.f32.xlu0 %v327
    %v329 = vpop.xlane.xlu0 %328
    %v330 = vrcp.pop %v329
    %v331 = vmul.f32 1.0, %v330
    %v332 = vmul.f32 %v327, %v331
    %v333 = vpack.c.bf16 %v332, %v332
    %334 = vst [vmem:[#allocation8] sm:$0xf] %v333
    // Predicated region
    $region34: #{tpu_custom_call.1} parent=1 // pred_check
      _
    $region35: #{tpu_custom_call.1} parent=1 // pred_check_branch
      %336 = sbr.rel (0) target = $region37
    $region36: #{tpu_custom_call.1} parent=1 // pred_region
      %s338 = ssub.s32 64, 64
      %339 = vsyncadd [#allocation4], %s338
      %s341 = sshll.u32 [#allocation8], 4
      %s342 = int_to_ptr.vmem [resolvable:$true] %s341
      %344 = dma.vmem_to_hbm [thread:$0]  %s342, 64, %s5, [#allocation4]
    $region37: #{tpu_custom_call.1} parent=1 // pred_fallthru
      _
    // Predicated region
    $region38: #{tpu_custom_call.1} parent=1 // pred_check
      _
    $region39: #{tpu_custom_call.1} parent=1 // pred_check_branch
      %346 = sbr.rel (0) target = $region41
    $region40: #{tpu_custom_call.1} parent=1 // pred_region
      %347 = dma.done [#allocation4], 64
    $region41: #{tpu_custom_call.1} parent=1 // pred_fallthru
      _
    %348 = vsyncpa [#allocation3], 1
    %349 = vsyncpa [#allocation6], 1
    %350 = vsyncpa [#allocation4], 1

</llo_original>
